<compile_context>
chip_gen: v5e
topology: v5e:2x2
jax: 0.10.0
libtpu: 0.0.40
codegen_flags: <defaults>
</compile_context>

<pallas_src>
import functools
import math

import jax
import jax.numpy as jnp
from jax import lax
from jax.experimental import pallas as pl
from jax.experimental.pallas import tpu as pltpu


# ------------------------------------------------------------------ config --
class Config:
    modals = ["vggish", "bgm_emotion", "emotion", "scene", "pose"]
    vggish_input_dim = 24
    bgm_emotion_input_dim = 12
    emotion_input_dim = 16
    scene_input_dim = 20
    pose_input_dim = 28
    modals_ouput_dim = 32          # == PGL_SUM input_size (d_model)
    lstm_layers = 1
    bidirectional = False


D_MODEL = Config.modals_ouput_dim   # 32
N_HEAD = 4
D_FF = 2048                         # nn.TransformerEncoderLayer default
EPS_TFM = 1e-5                      # TransformerEncoderLayer LayerNorm eps
EPS_PGL = 1e-6                      # norm_y / norm_linear eps
MASK_NEG = -1e30
CAT_IN = 128                        # lane-padded concat of modal inputs (>= 100)
VMEM_LIMIT_BYTES = 32 * 1024 * 1024  # == v7x scoped default; tiles sized well under


def _full_spec_g(arr):
    """Whole-array resident block for a plain 1-D row grid."""
    nd = arr.ndim
    return pl.BlockSpec(arr.shape, lambda i, _n=nd: (0,) * _n)


def _full_spec_p(arr):
    """Whole-array resident block for PrefetchScalarGridSpec kernels."""
    nd = arr.ndim
    return pl.BlockSpec(arr.shape, lambda i, t, _n=nd: (0,) * _n)


def _ln(x, w, b, eps):
    """PyTorch LayerNorm over the last dim (biased variance)."""
    mu = jnp.mean(x, axis=-1, keepdims=True)
    var = jnp.mean((x - mu) ** 2, axis=-1, keepdims=True)
    return (x - mu) * lax.rsqrt(var + eps) * w + b


# ------------------------------------------ kernel 1: packed frontend matmuls
def _frontend_kernel(x_ref, wblk_ref, bcat_ref, wf_ref, bf_ref, wih_ref,
                     bl_ref, gates_ref):
    # block-diagonal packed modal dense + relu: one [tile,128]@[128,160] matmul
    h = jnp.dot(x_ref[...], wblk_ref[...],
                preferred_element_type=jnp.float32) + bcat_ref[...]
    h = jnp.maximum(h, 0.0)                                   # [tile, 160]
    fused = jnp.dot(h, wf_ref[...],
                    preferred_element_type=jnp.float32) + bf_ref[...]
    fused = jnp.maximum(fused, 0.0)                           # [tile, 32]
    # LSTM input projection hoisted out of the recurrence (lane-dense output)
    gates_ref[...] = jnp.dot(fused, wih_ref[...],
                             preferred_element_type=jnp.float32) + bl_ref[...]


def frontend_gates(x_cat_pad, kp, *, tile_t):
    Tp = x_cat_pad.shape[0]
    nt = Tp // tile_t
    weights = (kp["w_blk"], kp["b_cat"], kp["w_fuse"], kp["b_fuse"],
               kp["w_ih"], kp["b_lstm"])
    in_specs = ([pl.BlockSpec((tile_t, CAT_IN), lambda i: (i, 0))]
                + [_full_spec_g(w) for w in weights])
    return pl.pallas_call(
        _frontend_kernel,
        out_shape=jax.ShapeDtypeStruct((Tp, 4 * D_MODEL), jnp.float32),
        grid=(nt,),
        in_specs=in_specs,
        out_specs=pl.BlockSpec((tile_t, 4 * D_MODEL), lambda i: (i, 0)),
        compiler_params=pltpu.CompilerParams(
            dimension_semantics=("parallel",),
            vmem_limit_bytes=VMEM_LIMIT_BYTES),
    )(x_cat_pad, *weights)


# --------------------------------------- kernel 2: LSTM recurrence + layer-1 KV
def _lstm_kernel(gates_ref, whh_ref, wkv_ref, ff_ref, kv_ref, hc_ref):
    tile_t, H = ff_ref.shape

    @pl.when(pl.program_id(0) == 0)
    def _():
        hc_ref[...] = jnp.zeros_like(hc_ref)

    whh = whh_ref[...]                                        # [H, 4H]

    def blk(b, carry):
        h, c = carry
        base = pl.multiple_of(b * 8, 8)
        g8 = gates_ref[pl.ds(base, 8), :]                     # [8, 4H]
        rows = []
        for r in range(8):                                    # unrolled x8
            g = g8[r:r + 1, :] + jnp.dot(h, whh,
                                         preferred_element_type=jnp.float32)
            i = jax.nn.sigmoid(g[:, 0:H])
            f = jax.nn.sigmoid(g[:, H:2 * H])
            gg = jnp.tanh(g[:, 2 * H:3 * H])
            o = jax.nn.sigmoid(g[:, 3 * H:4 * H])
            c = f * c + i * gg
            h = o * jnp.tanh(c)
            rows.append(h)
        ff_ref[pl.ds(base, 8), :] = jnp.concatenate(rows, axis=0)
        return (h, c)

    h, c = lax.fori_loop(0, tile_t // 8, blk,
                         (hc_ref[0:1, :], hc_ref[1:2, :]))
    hc_ref[0:1, :] = h                                        # carry across tiles
    hc_ref[1:2, :] = c

    # epilogue: layer-1 K/V projection (no biases; K-bias dropped, V-bias
    # folded into the output-projection bias in the wrapper)
    ff = ff_ref[...]
    kv_ref[...] = jnp.dot(ff.astype(jnp.bfloat16), wkv_ref[...],
                          preferred_element_type=jnp.float32
                          ).astype(jnp.bfloat16)


def lstm_and_kv1(gates, kp, *, tile_t):
    Tp = gates.shape[0]
    nt = Tp // tile_t
    weights = (kp["w_hh"], kp["enc"][0]["wkv"])
    in_specs = ([pl.BlockSpec((tile_t, 4 * D_MODEL), lambda i: (i, 0))]
                + [_full_spec_g(w) for w in weights])
    return pl.pallas_call(
        _lstm_kernel,
        out_shape=(jax.ShapeDtypeStruct((Tp, D_MODEL), jnp.float32),
                   jax.ShapeDtypeStruct((Tp, 2 * D_MODEL), jnp.bfloat16)),
        grid=(nt,),
        in_specs=in_specs,
        out_specs=(pl.BlockSpec((tile_t, D_MODEL), lambda i: (i, 0)),
                   pl.BlockSpec((tile_t, 2 * D_MODEL), lambda i: (i, 0))),
        scratch_shapes=[pltpu.VMEM((8, D_MODEL), jnp.float32)],   # rows 0/1 = h/c
        compiler_params=pltpu.CompilerParams(
            dimension_semantics=("arbitrary",),        # sequential carry
            vmem_limit_bytes=VMEM_LIMIT_BYTES),
    )(gates, *weights)


# ------------------------------------------- transformer encoder layer core --
def _encoder_core(x_t, kv_all, wq, bq, wo_bf, bo_eff, ln1w, ln1b,
                  w1_bf, b1, w2_bf, b2, ln2w, ln2b, *, nhead, t_actual):
    tile_t, D = x_t.shape
    Tp = kv_all.shape[0]
    hd = D // nhead
    scale = 1.0 / math.sqrt(hd)

    # Q with bias, scale folded in, cast to bf16 for the MXU
    q = ((jnp.dot(x_t, wq, preferred_element_type=jnp.float32) + bq) * scale
         ).astype(jnp.bfloat16)
    k = kv_all[:, 0:D]          # bf16, precomputed, no bias (softmax-invariant)
    v = kv_all[:, D:2 * D]      # bf16, precomputed, bias folded into bo_eff

    key_idx = lax.broadcasted_iota(jnp.int32, (1, Tp), 1)
    mask_add = jnp.where(key_idx < t_actual, 0.0, MASK_NEG)    # [1, Tp]

    nt_dims = (((1,), (1,)), ((), ()))                         # q @ k^T
    attn = None
    for h in range(nhead):
        qh = q[:, h * hd:(h + 1) * hd]
        kh = k[:, h * hd:(h + 1) * hd]
        vh = v[:, h * hd:(h + 1) * hd]
        s = lax.dot_general(qh, kh, nt_dims,
                            preferred_element_type=jnp.float32)  # [tile, Tp] f32
        s = s + mask_add
        p = jnp.exp(s - jnp.max(s, axis=-1, keepdims=True))      # f32 softmax
        denom = jnp.sum(p, axis=-1, keepdims=True)
        p = p * pl.reciprocal(denom, approx=True)
        ho = jnp.dot(p.astype(jnp.bfloat16), vh,
                     preferred_element_type=jnp.float32)         # [tile, hd]
        # concat(head_h) @ Wo == sum_h head_h @ Wo[h*hd:(h+1)*hd, :]
        contrib = jnp.dot(ho.astype(jnp.bfloat16),
                          wo_bf[h * hd:(h + 1) * hd, :],
                          preferred_element_type=jnp.float32)
        attn = contrib if attn is None else attn + contrib
    attn = attn + bo_eff                                          # b_o + b_v @ Wo

    # post-norm (norm_first=False): x = LN(x + attn); x = LN(x + FFN(x))
    x1 = _ln(x_t + attn, ln1w, ln1b, EPS_TFM)
    ff = (jnp.dot(x1.astype(jnp.bfloat16), w1_bf,
                  preferred_element_type=jnp.float32) + b1).astype(jnp.bfloat16)
    ff = jnp.maximum(ff, 0.0)                                     # bf16 relu
    ff2 = jnp.dot(ff, w2_bf, preferred_element_type=jnp.float32) + b2
    return _ln(x1 + ff2, ln2w, ln2b, EPS_TFM)


# ------------------------------------------- kernel 3: encoder layer 1 (+KV2)
def _encoder_layer_kernel(t_ref, x_ref, kv_ref,
                          wq_ref, bq_ref, wo_ref, bo_ref, ln1w_ref, ln1b_ref,
                          w1_ref, b1_ref, w2_ref, b2_ref, ln2w_ref, ln2b_ref,
                          wkv_next_ref, o_ref, kv_next_ref, *, nhead):
    out = _encoder_core(
        x_ref[...], kv_ref[...], wq_ref[...], bq_ref[...], wo_ref[...],
        bo_ref[...], ln1w_ref[...], ln1b_ref[...], w1_ref[...], b1_ref[...],
        w2_ref[...], b2_ref[...], ln2w_ref[...], ln2b_ref[...],
        nhead=nhead, t_actual=t_ref[0])
    o_ref[...] = out
    # epilogue: next layer's K/V projection (no biases)
    kv_next_ref[...] = jnp.dot(out.astype(jnp.bfloat16), wkv_next_ref[...],
                               preferred_element_type=jnp.float32
                               ).astype(jnp.bfloat16)


def _enc_weight_args(p):
    return (p["wq"], p["bq"], p["wo"], p["bo"], p["ln1w"], p["ln1b"],
            p["w1"], p["b1"], p["w2"], p["b2"], p["ln2w"], p["ln2b"])


def encoder_layer1(x, kv1, enc1, enc2, t_arr, *, tile_t):
    Tp, D = x.shape
    nt = Tp // tile_t
    weights = _enc_weight_args(enc1) + (enc2["wkv"],)
    in_specs = ([pl.BlockSpec((tile_t, D), lambda i, t: (i, 0)),
                 pl.BlockSpec((Tp, 2 * D), lambda i, t: (0, 0))]   # resident KV
                + [_full_spec_p(w) for w in weights])
    grid_spec = pltpu.PrefetchScalarGridSpec(
        num_scalar_prefetch=1, grid=(nt,),
        in_specs=in_specs,
        out_specs=(pl.BlockSpec((tile_t, D), lambda i, t: (i, 0)),
                   pl.BlockSpec((tile_t, 2 * D), lambda i, t: (i, 0))))
    return pl.pallas_call(
        functools.partial(_encoder_layer_kernel, nhead=N_HEAD),
        out_shape=(jax.ShapeDtypeStruct((Tp, D), jnp.float32),
                   jax.ShapeDtypeStruct((Tp, 2 * D), jnp.bfloat16)),
        grid_spec=grid_spec,
        compiler_params=pltpu.CompilerParams(
            dimension_semantics=("parallel",),
            vmem_limit_bytes=VMEM_LIMIT_BYTES),
    )(t_arr, x, kv1, *weights)


# ------------------------------------ kernel 4: encoder layer 2 + fused head --
def _encoder_head_kernel(t_ref, x_ref, kv_ref, res_ref,
                         wq_ref, bq_ref, wo_ref, bo_ref, ln1w_ref, ln1b_ref,
                         w1_ref, b1_ref, w2_ref, b2_ref, ln2w_ref, ln2b_ref,
                         nyw_ref, nyb_ref, l0w_ref, l0b_ref, l1w_ref, l1b_ref,
                         nlw_ref, nlb_ref, l2w_ref, l2b_ref,
                         o_ref, *, nhead):
    wv = _encoder_core(
        x_ref[...], kv_ref[...], wq_ref[...], bq_ref[...], wo_ref[...],
        bo_ref[...], ln1w_ref[...], ln1b_ref[...], w1_ref[...], b1_ref[...],
        w2_ref[...], b2_ref[...], ln2w_ref[...], ln2b_ref[...],
        nhead=nhead, t_actual=t_ref[0])

    # fused regressor head: y = sigmoid(L2(LN(relu(L1(L0(LN(wv + res)))))))
    y = wv + res_ref[...]
    y = _ln(y, nyw_ref[...], nyb_ref[...], EPS_PGL)            # norm_y
    y = jnp.dot(y, l0w_ref[...], preferred_element_type=jnp.float32) + l0b_ref[...]
    y = jnp.dot(y, l1w_ref[...], preferred_element_type=jnp.float32) + l1b_ref[...]
    y = jnp.maximum(y, 0.0)                                    # relu
    y = _ln(y, nlw_ref[...], nlb_ref[...], EPS_PGL)            # norm_linear
    # final [*,1] projection emitted as a [1, tile_t] row -> lane-dense store
    y_row = lax.dot_general(l2w_ref[...], y, (((1,), (1,)), ((), ())),
                            preferred_element_type=jnp.float32)
    y_row = jax.nn.sigmoid(y_row + l2b_ref[...])
    o_ref[...] = jnp.broadcast_to(y_row.reshape(1, 1, -1), o_ref.shape)


def encoder_head(x, kv, residual, enc_p, head_p, t_arr, *, tile_t):
    Tp, D = x.shape
    nt = Tp // tile_t
    weights = _enc_weight_args(enc_p) + (
        head_p["nyw"], head_p["nyb"], head_p["l0w"], head_p["l0b"],
        head_p["l1w"], head_p["l1b"], head_p["nlw"], head_p["nlb"],
        head_p["l2w"], head_p["l2b"])
    in_specs = ([pl.BlockSpec((tile_t, D), lambda i, t: (i, 0)),
                 pl.BlockSpec((Tp, 2 * D), lambda i, t: (0, 0)),   # resident KV
                 pl.BlockSpec((tile_t, D), lambda i, t: (i, 0))]
                + [_full_spec_p(w) for w in weights])
    grid_spec = pltpu.PrefetchScalarGridSpec(
        num_scalar_prefetch=1, grid=(nt,),
        in_specs=in_specs,
        out_specs=pl.BlockSpec((1, 8, tile_t), lambda i, t: (i, 0, 0)))
    return pl.pallas_call(
        functools.partial(_encoder_head_kernel, nhead=N_HEAD),
        out_shape=jax.ShapeDtypeStruct((nt, 8, tile_t), jnp.float32),
        grid_spec=grid_spec,
        compiler_params=pltpu.CompilerParams(
            dimension_semantics=("parallel",),
            vmem_limit_bytes=VMEM_LIMIT_BYTES),
    )(t_arr, x, kv, residual, *weights)


# -------------------------------------------------------------- parameters --
def _uniform(key, shape, fan_in):
    bound = 1.0 / math.sqrt(fan_in)
    return jax.random.uniform(key, shape, jnp.float32, -bound, bound)


def _linear_params(key, din, dout):
    kw, kb = jax.random.split(key)
    # stored already transposed: [din, dout]
    return _uniform(kw, (din, dout), din), _uniform(kb, (dout,), din)


def _encoder_layer_params(key, d, dff):
    ks = jax.random.split(key, 4)
    wqkv, bqkv = _linear_params(ks[0], d, 3 * d)
    wo, bo = _linear_params(ks[1], d, d)
    w1, b1 = _linear_params(ks[2], d, dff)
    w2, b2 = _linear_params(ks[3], dff, d)
    return dict(wqkv=wqkv, bqkv=bqkv, wo=wo, bo=bo,
                ln1w=jnp.ones((d,), jnp.float32), ln1b=jnp.zeros((d,), jnp.float32),
                w1=w1, b1=b1, w2=w2, b2=b2,
                ln2w=jnp.ones((d,), jnp.float32), ln2b=jnp.zeros((d,), jnp.float32))


def init_params(key, cfg):
    ks = jax.random.split(key, 12)
    d = cfg.modals_ouput_dim
    params = {}
    params["vggish_dense"] = _linear_params(ks[0], cfg.vggish_input_dim, d)
    params["bgm_emotion_dense"] = _linear_params(ks[1], cfg.bgm_emotion_input_dim, d)
    params["emotion_dense"] = _linear_params(ks[2], cfg.emotion_input_dim, d)
    params["scene_dense"] = _linear_params(ks[3], cfg.scene_input_dim, d)
    params["pose_dense"] = _linear_params(ks[4], cfg.pose_input_dim, d)
    params["modal_fusion_dense"] = _linear_params(ks[5], d * len(cfg.modals), d)
    # LSTM: gates ordered (i,f,g,o); weights stored transposed; biases summed.
    H = d
    kih, khh, kbi, kbh = jax.random.split(ks[6], 4)
    params["lstm"] = (
        _uniform(kih, (d, 4 * H), H),
        _uniform(khh, (H, 4 * H), H),
        _uniform(kbi, (4 * H,), H) + _uniform(kbh, (4 * H,), H))
    params["encoder_layers"] = [
        _encoder_layer_params(ks[7], D_MODEL, D_FF),
        _encoder_layer_params(ks[8], D_MODEL, D_FF)]
    d4 = D_MODEL // 4
    l0_w, l0_b = _linear_params(ks[9], D_MODEL, d4)
    l1_w, l1_b = _linear_params(ks[10], d4, d4)
    l2_w, l2_b = _linear_params(ks[11], d4, 1)
    params["head"] = dict(
        norm_y_w=jnp.ones((D_MODEL,), jnp.float32),
        norm_y_b=jnp.zeros((D_MODEL,), jnp.float32),
        l0_w=l0_w, l0_b=l0_b, l1_w=l1_w, l1_b=l1_b,
        norm_lin_w=jnp.ones((d4,), jnp.float32),
        norm_lin_b=jnp.zeros((d4,), jnp.float32),
        l2_w=l2_w, l2_b=l2_b)
    return params


def prepare_params(params, cfg):
    """One-time prep into kernel-ready layouts (block-diag packing, bias
    folding, bf16 casts)."""
    d = cfg.modals_ouput_dim
    names = ["vggish", "bgm_emotion", "emotion", "scene", "pose"]
    dims = [cfg.vggish_input_dim, cfg.bgm_emotion_input_dim,
            cfg.emotion_input_dim, cfg.scene_input_dim, cfg.pose_input_dim]

    # pack the 5 modal dense layers into one block-diagonal matmul
    w_blk = jnp.zeros((CAT_IN, len(names) * d), jnp.float32)
    b_cat = jnp.zeros((len(names) * d,), jnp.float32)
    off = 0
    for m, (name, din) in enumerate(zip(names, dims)):
        w, b = params[f"{name}_dense"]
        w_blk = w_blk.at[off:off + din, m * d:(m + 1) * d].set(w)
        b_cat = b_cat.at[m * d:(m + 1) * d].set(b)
        off += din

    wf, bf = params["modal_fusion_dense"]
    wih, whh, bl = params["lstm"]

    def prep_enc(p):
        wq = p["wqkv"][:, 0:d]
        wk = p["wqkv"][:, d:2 * d]
        wv_ = p["wqkv"][:, 2 * d:3 * d]
        bq = p["bqkv"][0:d]
        bv = p["bqkv"][2 * d:3 * d]
        bo_eff = bv @ p["wo"] + p["bo"]        # fold V-bias into output bias
        return dict(
            wq=wq, bq=bq.reshape(1, -1),
            wkv=jnp.concatenate([wk, wv_], axis=1).astype(jnp.bfloat16),
            wo=p["wo"].astype(jnp.bfloat16), bo=bo_eff.reshape(1, -1),
            ln1w=p["ln1w"].reshape(1, -1), ln1b=p["ln1b"].reshape(1, -1),
            w1=p["w1"].astype(jnp.bfloat16), b1=p["b1"].reshape(1, -1),
            w2=p["w2"].astype(jnp.bfloat16), b2=p["b2"].reshape(1, -1),
            ln2w=p["ln2w"].reshape(1, -1), ln2b=p["ln2b"].reshape(1, -1))

    h = params["head"]
    return dict(
        w_blk=w_blk, b_cat=b_cat.reshape(1, -1),
        w_fuse=wf, b_fuse=bf.reshape(1, -1),
        w_ih=wih, b_lstm=bl.reshape(1, -1), w_hh=whh,
        enc=[prep_enc(params["encoder_layers"][0]),
             prep_enc(params["encoder_layers"][1])],
        head=dict(
            nyw=h["norm_y_w"].reshape(1, -1), nyb=h["norm_y_b"].reshape(1, -1),
            l0w=h["l0_w"], l0b=h["l0_b"].reshape(1, -1),
            l1w=h["l1_w"], l1b=h["l1_b"].reshape(1, -1),
            nlw=h["norm_lin_w"].reshape(1, -1), nlb=h["norm_lin_b"].reshape(1, -1),
            l2w=h["l2_w"].reshape(1, -1), l2b=h["l2_b"].reshape(1, 1)))


# ------------------------------------------------------------ full forward --
def pgl_sum_forward(kp, modal_inputs):
    """modal_inputs: tuple of 5 [T, dim_m] arrays. Returns (y:[1,T], attn=0)."""
    T = modal_inputs[0].shape[0]
    Tp16 = ((T + 15) // 16) * 16                  # bf16 sublane packing
    tile_t = 256 if Tp16 >= 256 else Tp16
    # bound the [tile_t, Tp] f32 score tile so 4-head attention + the 2 MiB
    # FFN intermediate + resident bf16 K/V stay well under the 32 MiB scoped
    # VMEM limit on all of v5e / v6e / v7x.
    while tile_t > 16 and tile_t * Tp16 * 4 > (8 << 20):
        tile_t //= 2
    Tp = ((Tp16 + tile_t - 1) // tile_t) * tile_t
    nt = Tp // tile_t

    # concatenate modal inputs (lane-padded to 128) for the packed frontend
    x_cat = jnp.concatenate(modal_inputs, axis=1)                      # [T, 100]
    x_cat = jnp.pad(x_cat, ((0, Tp - T), (0, CAT_IN - x_cat.shape[1])))

    gates = frontend_gates(x_cat, kp, tile_t=tile_t)                   # [Tp, 128]
    frame_features, kv1 = lstm_and_kv1(gates, kp, tile_t=tile_t)       # [Tp,32],[Tp,64]bf16

    t_arr = jnp.array([T], jnp.int32)                                  # scalar prefetch
    residual = frame_features
    wv1, kv2 = encoder_layer1(frame_features, kv1, kp["enc"][0], kp["enc"][1],
                              t_arr, tile_t=tile_t)                    # [Tp,32],[Tp,64]bf16
    y_blocks = encoder_head(wv1, kv2, residual, kp["enc"][1], kp["head"],
                            t_arr, tile_t=tile_t)                      # [nt, 8, tile_t]
    y = y_blocks[:, 0, :].reshape(1, Tp)[:, :T]                        # view(1, -1)
    attn_weights = 0                                                   # as in MultiAttention
    return y, attn_weights


# -------------------------------------------------------------------- main --
if __name__ == "__main__":
    cfg = Config()
    T = 8
    key = jax.random.PRNGKey(0)
    k_in, k_par = jax.random.split(key)
    ki = jax.random.split(k_in, 5)
    vggish = jax.random.normal(ki[0], (T, cfg.vggish_input_dim), jnp.float32)
    bgm_emotion = jax.random.normal(ki[1], (T, cfg.bgm_emotion_input_dim), jnp.float32)
    emotion = jax.random.normal(ki[2], (T, cfg.emotion_input_dim), jnp.float32)
    scene = jax.random.normal(ki[3], (T, cfg.scene_input_dim), jnp.float32)
    pose = jax.random.normal(ki[4], (T, cfg.pose_input_dim), jnp.float32)

    params = init_params(k_par, cfg)
    kp = prepare_params(params, cfg)
    y, attn_weights = pgl_sum_forward(kp, (vggish, bgm_emotion, emotion, scene, pose))
    y = jax.block_until_ready(y)
    assert y.shape == (1, T)
    assert bool(jnp.all(jnp.isfinite(y)))
    assert bool(jnp.all((y >= 0.0) & (y <= 1.0)))
    print("KERNEL_OK")
</pallas_src>

<mosaic_0001>
module attributes {stable_mosaic.version = 11 : i64} {
  func.func @_frontend_kernel(%arg0: i32, %arg1: memref<16x128xf32, #tpu.memory_space<vmem>>, %arg2: memref<128x160xf32, #tpu.memory_space<vmem>>, %arg3: memref<1x160xf32, #tpu.memory_space<vmem>>, %arg4: memref<160x32xf32, #tpu.memory_space<vmem>>, %arg5: memref<1x32xf32, #tpu.memory_space<vmem>>, %arg6: memref<32x128xf32, #tpu.memory_space<vmem>>, %arg7: memref<1x128xf32, #tpu.memory_space<vmem>>, %arg8: memref<16x128xf32, #tpu.memory_space<vmem>>) attributes {dimension_semantics = [#tpu.dimension_semantics<parallel>], iteration_bounds = array<i64: 1>, scalar_prefetch = 0 : i64, scratch_operands = 0 : i64, tpu.core_type = #tpu.core_type<tc>, window_params = [{transform_indices = @transform_0, window_bounds = array<i64: 16, 128>}, {pipeline_mode = #tpu.pipeline_mode<synchronous>, transform_indices = @transform_1, window_bounds = array<i64: 128, 160>}, {pipeline_mode = #tpu.pipeline_mode<synchronous>, transform_indices = @transform_2, window_bounds = array<i64: 1, 160>}, {pipeline_mode = #tpu.pipeline_mode<synchronous>, transform_indices = @transform_3, window_bounds = array<i64: 160, 32>}, {pipeline_mode = #tpu.pipeline_mode<synchronous>, transform_indices = @transform_4, window_bounds = array<i64: 1, 32>}, {pipeline_mode = #tpu.pipeline_mode<synchronous>, transform_indices = @transform_5, window_bounds = array<i64: 32, 128>}, {pipeline_mode = #tpu.pipeline_mode<synchronous>, transform_indices = @transform_6, window_bounds = array<i64: 1, 128>}, {transform_indices = @transform_7, window_bounds = array<i64: 16, 128>}]} {
    %c0 = arith.constant 0 : index
    %c0_0 = arith.constant 0 : index
    %0 = vector.load %arg1[%c0, %c0_0] : memref<16x128xf32, #tpu.memory_space<vmem>>, vector<16x128xf32>
    %c0_1 = arith.constant 0 : index
    %c0_2 = arith.constant 0 : index
    %1 = vector.load %arg2[%c0_1, %c0_2] : memref<128x160xf32, #tpu.memory_space<vmem>>, vector<128x160xf32>
    %cst = arith.constant dense<0.000000e+00> : vector<16x160xf32>
    %2 = tpu.matmul %0, %1, %cst {dimension_numbers = #tpu.dot_dimension_numbers<[1], [0], [0], [1], [0, 0, 1, 1], [], []>} : vector<16x128xf32>, vector<128x160xf32>, vector<16x160xf32> -> vector<16x160xf32>
    %c0_3 = arith.constant 0 : index
    %c0_4 = arith.constant 0 : index
    %3 = vector.load %arg3[%c0_3, %c0_4] : memref<1x160xf32, #tpu.memory_space<vmem>>, vector<1x160xf32>
    %4 = vector.broadcast %3 : vector<1x160xf32> to vector<16x160xf32>
    %5 = arith.addf %2, %4 : vector<16x160xf32>
    %cst_5 = arith.constant 0.000000e+00 : f32
    %6 = vector.broadcast %cst_5 : f32 to vector<16x160xf32>
    %7 = arith.maximumf %5, %6 : vector<16x160xf32>
    %c0_6 = arith.constant 0 : index
    %c0_7 = arith.constant 0 : index
    %8 = vector.load %arg4[%c0_6, %c0_7] : memref<160x32xf32, #tpu.memory_space<vmem>>, vector<160x32xf32>
    %cst_8 = arith.constant dense<0.000000e+00> : vector<16x32xf32>
    %9 = tpu.matmul %7, %8, %cst_8 {dimension_numbers = #tpu.dot_dimension_numbers<[1], [0], [0], [1], [0, 0, 1, 1], [], []>} : vector<16x160xf32>, vector<160x32xf32>, vector<16x32xf32> -> vector<16x32xf32>
    %c0_9 = arith.constant 0 : index
    %c0_10 = arith.constant 0 : index
    %10 = vector.load %arg5[%c0_9, %c0_10] : memref<1x32xf32, #tpu.memory_space<vmem>>, vector<1x32xf32>
    %11 = vector.broadcast %10 : vector<1x32xf32> to vector<16x32xf32>
    %12 = arith.addf %9, %11 : vector<16x32xf32>
    %cst_11 = arith.constant 0.000000e+00 : f32
    %13 = vector.broadcast %cst_11 : f32 to vector<16x32xf32>
    %14 = arith.maximumf %12, %13 : vector<16x32xf32>
    %c0_12 = arith.constant 0 : index
    %c0_13 = arith.constant 0 : index
    %15 = vector.load %arg6[%c0_12, %c0_13] : memref<32x128xf32, #tpu.memory_space<vmem>>, vector<32x128xf32>
    %cst_14 = arith.constant dense<0.000000e+00> : vector<16x128xf32>
    %16 = tpu.matmul %14, %15, %cst_14 {dimension_numbers = #tpu.dot_dimension_numbers<[1], [0], [0], [1], [0, 0, 1, 1], [], []>} : vector<16x32xf32>, vector<32x128xf32>, vector<16x128xf32> -> vector<16x128xf32>
    %c0_15 = arith.constant 0 : index
    %c0_16 = arith.constant 0 : index
    %17 = vector.load %arg7[%c0_15, %c0_16] : memref<1x128xf32, #tpu.memory_space<vmem>>, vector<1x128xf32>
    %18 = vector.broadcast %17 : vector<1x128xf32> to vector<16x128xf32>
    %19 = arith.addf %16, %18 : vector<16x128xf32>
    %c0_17 = arith.constant 0 : index
    %c0_18 = arith.constant 0 : index
    %20 = vector.load %arg8[%c0_17, %c0_18] : memref<16x128xf32, #tpu.memory_space<vmem>>, vector<16x128xf32>
    tpu.vector_store %arg8[%c0_17, %c0_18], %19 {strides = array<i32>} : memref<16x128xf32, #tpu.memory_space<vmem>>, vector<16x128xf32>,
    return
  }
  func.func @transform_0(%arg0: i32) -> (i32, i32) {
    %c0_i32 = arith.constant 0 : i32
    %c0_i32_0 = arith.constant 0 : i32
    return %arg0, %c0_i32 : i32, i32
  }
  func.func @transform_1(%arg0: i32) -> (i32, i32) {
    %c0_i32 = arith.constant 0 : i32
    %c0_i32_0 = arith.constant 0 : i32
    %c0_i32_1 = arith.constant 0 : i32
    return %c0_i32, %c0_i32_0 : i32, i32
  }
  func.func @transform_2(%arg0: i32) -> (i32, i32) {
    %c0_i32 = arith.constant 0 : i32
    %c0_i32_0 = arith.constant 0 : i32
    %c0_i32_1 = arith.constant 0 : i32
    return %c0_i32, %c0_i32_0 : i32, i32
  }
  func.func @transform_3(%arg0: i32) -> (i32, i32) {
    %c0_i32 = arith.constant 0 : i32
    %c0_i32_0 = arith.constant 0 : i32
    %c0_i32_1 = arith.constant 0 : i32
    return %c0_i32, %c0_i32_0 : i32, i32
  }
  func.func @transform_4(%arg0: i32) -> (i32, i32) {
    %c0_i32 = arith.constant 0 : i32
    %c0_i32_0 = arith.constant 0 : i32
    %c0_i32_1 = arith.constant 0 : i32
    return %c0_i32, %c0_i32_0 : i32, i32
  }
  func.func @transform_5(%arg0: i32) -> (i32, i32) {
    %c0_i32 = arith.constant 0 : i32
    %c0_i32_0 = arith.constant 0 : i32
    %c0_i32_1 = arith.constant 0 : i32
    return %c0_i32, %c0_i32_0 : i32, i32
  }
  func.func @transform_6(%arg0: i32) -> (i32, i32) {
    %c0_i32 = arith.constant 0 : i32
    %c0_i32_0 = arith.constant 0 : i32
    %c0_i32_1 = arith.constant 0 : i32
    return %c0_i32, %c0_i32_0 : i32, i32
  }
  func.func @transform_7(%arg0: i32) -> (i32, i32) {
    %c0_i32 = arith.constant 0 : i32
    %c0_i32_0 = arith.constant 0 : i32
    return %arg0, %c0_i32 : i32, i32
  }
}

</mosaic_0001>

<llo_original>
// kernel: tpu_custom_call.1
$region0: #{tpu_custom_call.1}
  #allocation0 [shape = 'u32[]', space=smem, size = 0x4, offset = 0x4, fixed_abs, tag = 'smem constant byte address 0x4 - core index']
  #allocation1 [shape = 'u32[72,128]{1,0:T(1,128)}', space=vmem, size = 0x9000, scoped, tag = 'internal scratch']
  %s0 = inlined_call_operand.vmem [shape: f32[16,128], index: 0, kind: input, shape index: {}]
  %s1 = inlined_call_operand.vmem [shape: f32[128,160], index: 1, kind: input, shape index: {}]
  %s2 = inlined_call_operand.vmem [shape: f32[1,160], index: 2, kind: input, shape index: {}]
  %s3 = inlined_call_operand.vmem [shape: f32[160,32], index: 3, kind: input, shape index: {}]
  %s4 = inlined_call_operand.vmem [shape: f32[1,32], index: 4, kind: input, shape index: {}]
  %s5 = inlined_call_operand.vmem [shape: f32[32,128], index: 5, kind: input, shape index: {}]
  %s6 = inlined_call_operand.vmem [shape: f32[1,128], index: 6, kind: input, shape index: {}]
  %s7 = inlined_call_operand.hbm [shape: f32[16,128], index: 7, kind: output, shape index: {}]
  %s8 = sld [smem:[#allocation0]]
  $region38: #{tpu_custom_call.1} parent=0
    _
  %s10 = ssub.s32 1, %s8
  %s11 = scalar_select 0, %s10, %s8
  $region1: #{tpu_custom_call.1} parent=0
    #allocation2 [shape = 'u8[8192]{0}', space=vmem, size = 0x2000, scoped, tag = 'output window, operand 0, single buffered']
    #allocation3 [shape = 's32[1]{0}', space=sflag, size = 0x4, scoped, tag = 'scoped memory for tpu_custom_call.1']
    %12 = vsyncpa [#allocation3], 0
    // Predicated region
    $region2: #{tpu_custom_call.1} parent=1 // pred_check
      _
    $region3: #{tpu_custom_call.1} parent=1 // pred_check_branch
      %14 = sbr.rel (0) target = $region5
    $region4: #{tpu_custom_call.1} parent=1 // pred_region
      _
    $region5: #{tpu_custom_call.1} parent=1 // pred_fallthru
      _
    // Predicated region
    $region6: #{tpu_custom_call.1} parent=1 // pred_check
      _
    $region7: #{tpu_custom_call.1} parent=1 // pred_check_branch
      %16 = sbr.rel (0) target = $region9
    $region8: #{tpu_custom_call.1} parent=1 // pred_region
      _
    $region9: #{tpu_custom_call.1} parent=1 // pred_fallthru
      _
    // Predicated region
    $region10: #{tpu_custom_call.1} parent=1 // pred_check
      _
    $region11: #{tpu_custom_call.1} parent=1 // pred_check_branch
      %18 = sbr.rel (0) target = $region13
    $region12: #{tpu_custom_call.1} parent=1 // pred_region
      _
    $region13: #{tpu_custom_call.1} parent=1 // pred_fallthru
      _
    // Predicated region
    $region14: #{tpu_custom_call.1} parent=1 // pred_check
      _
    $region15: #{tpu_custom_call.1} parent=1 // pred_check_branch
      %20 = sbr.rel (0) target = $region17
    $region16: #{tpu_custom_call.1} parent=1 // pred_region
      _
    $region17: #{tpu_custom_call.1} parent=1 // pred_fallthru
      _
    // Predicated region
    $region18: #{tpu_custom_call.1} parent=1 // pred_check
      _
    $region19: #{tpu_custom_call.1} parent=1 // pred_check_branch
      %22 = sbr.rel (0) target = $region21
    $region20: #{tpu_custom_call.1} parent=1 // pred_region
      _
    $region21: #{tpu_custom_call.1} parent=1 // pred_fallthru
      _
    // Predicated region
    $region22: #{tpu_custom_call.1} parent=1 // pred_check
      _
    $region23: #{tpu_custom_call.1} parent=1 // pred_check_branch
      %24 = sbr.rel (0) target = $region25
    $region24: #{tpu_custom_call.1} parent=1 // pred_region
      _
    $region25: #{tpu_custom_call.1} parent=1 // pred_fallthru
      _
    // Predicated region
    $region26: #{tpu_custom_call.1} parent=1 // pred_check
      _
    $region27: #{tpu_custom_call.1} parent=1 // pred_check_branch
      %26 = sbr.rel (0) target = $region29
    $region28: #{tpu_custom_call.1} parent=1 // pred_region
      _
    $region29: #{tpu_custom_call.1} parent=1 // pred_fallthru
      _
    %v27 = vld [vmem:[%s0] sm:$0xff]
    %v28 = vld [vmem:[%s0 + $0x8] sm:$0xff]
    %v29 = vld [vmem:[%s1] sm:$0xff]
    %v30 = vld [vmem:[%s1 + $0x8] sm:$0xff]
    %v31 = vld [vmem:[%s1 + $0x10] sm:$0xff]
    %v32 = vld [vmem:[%s1 + $0x18] sm:$0xff]
    %v33 = vld [vmem:[%s1 + $0x20] sm:$0xff]
    %v34 = vld [vmem:[%s1 + $0x28] sm:$0xff]
    %v35 = vld [vmem:[%s1 + $0x30] sm:$0xff]
    %v36 = vld [vmem:[%s1 + $0x38] sm:$0xff]
    %v37 = vld [vmem:[%s1 + $0x40] sm:$0xff]
    %v38 = vld [vmem:[%s1 + $0x48] sm:$0xff]
    %v39 = vld [vmem:[%s1 + $0x50] sm:$0xff]
    %v40 = vld [vmem:[%s1 + $0x58] sm:$0xff]
    %v41 = vld [vmem:[%s1 + $0x60] sm:$0xff]
    %v42 = vld [vmem:[%s1 + $0x68] sm:$0xff]
    %v43 = vld [vmem:[%s1 + $0x70] sm:$0xff]
    %v44 = vld [vmem:[%s1 + $0x78] sm:$0xff]
    %v45 = vld [vmem:[%s1 + $0x80] sm:$0xff]
    %v46 = vld [vmem:[%s1 + $0x88] sm:$0xff]
    %v47 = vld [vmem:[%s1 + $0x90] sm:$0xff]
    %v48 = vld [vmem:[%s1 + $0x98] sm:$0xff]
    %v49 = vld [vmem:[%s1 + $0xa0] sm:$0xff]
    %v50 = vld [vmem:[%s1 + $0xa8] sm:$0xff]
    %v51 = vld [vmem:[%s1 + $0xb0] sm:$0xff]
    %v52 = vld [vmem:[%s1 + $0xb8] sm:$0xff]
    %v53 = vld [vmem:[%s1 + $0xc0] sm:$0xff]
    %v54 = vld [vmem:[%s1 + $0xc8] sm:$0xff]
    %v55 = vld [vmem:[%s1 + $0xd0] sm:$0xff]
    %v56 = vld [vmem:[%s1 + $0xd8] sm:$0xff]
    %v57 = vld [vmem:[%s1 + $0xe0] sm:$0xff]
    %v58 = vld [vmem:[%s1 + $0xe8] sm:$0xff]
    %v59 = vld [vmem:[%s1 + $0xf0] sm:$0xff]
    %v60 = vld [vmem:[%s1 + $0xf8] sm:$0xff]
    %v61 = vld [vmem:[%s2] sm:$0x3]
    %v63 = vperm.slane %v61, 0
    %v64 = vperm.slane %v61, 1
    %67 = vmatpush.msra.mxu0 %v59
    %68 = vmatpush.msra.mxu0 %v57
    %69 = vmatpush.msra.mxu0 %v55
    %70 = vmatpush.msra.mxu0 %v53
    %71 = vmatpush.msra.mxu0 %v51
    %72 = vmatpush.msra.mxu0 %v49
    %73 = vmatpush.msra.mxu0 %v47
    %74 = vmatpush.msra.mxu0 %v45
    %75 = vmatpush.msra.mxu0 %v43
    %76 = vmatpush.msra.mxu0 %v41
    %77 = vmatpush.msra.mxu0 %v39
    %78 = vmatpush.msra.mxu0 %v37
    %79 = vmatpush.msra.mxu0 %v35
    %80 = vmatpush.msra.mxu0 %v33
    %81 = vmatpush.msra.mxu0 %v31
    %82 = vmatpush.msra.mxu0 %v29
    %83 = vmatmul.f32.gmra.mxu0 %v27
    %v84 = vpop.f32.mrf.mxu0
    %v85 = vadd.f32 %v63, %v84
    %86 = vmatmul.f32.gmra.mxu0 %v28
    %v87 = vpop.f32.mrf.mxu0
    %v88 = vadd.f32 %v63, %v87
    %89 = vdwg.mxu0
    %90 = vmatpush.msra.mxu0 %v60
    %91 = vmatpush.msra.mxu0 %v58
    %92 = vmatpush.msra.mxu0 %v56
    %93 = vmatpush.msra.mxu0 %v54
    %94 = vmatpush.msra.mxu0 %v52
    %95 = vmatpush.msra.mxu0 %v50
    %96 = vmatpush.msra.mxu0 %v48
    %97 = vmatpush.msra.mxu0 %v46
    %98 = vmatpush.msra.mxu0 %v44
    %99 = vmatpush.msra.mxu0 %v42
    %100 = vmatpush.msra.mxu0 %v40
    %101 = vmatpush.msra.mxu0 %v38
    %102 = vmatpush.msra.mxu0 %v36
    %103 = vmatpush.msra.mxu0 %v34
    %104 = vmatpush.msra.mxu0 %v32
    %105 = vmatpush.msra.mxu0 %v30
    %106 = vmatmul.f32.gmra.mxu0 %v27
    %v107 = vpop.f32.mrf.mxu0
    %v108 = vadd.f32 %v64, %v107
    %109 = vmatmul.f32.gmra.mxu0 %v28
    %v110 = vpop.f32.mrf.mxu0
    %v111 = vadd.f32 %v64, %v110
    %112 = vdwg.mxu0
    %v113 = vmax.f32 %v85, 0.0
    %v114 = vmax.f32 %v108, 0.0
    %v115 = vmax.f32 %v88, 0.0
    %v116 = vmax.f32 %v111, 0.0
    %v117 = vld [vmem:[%s3] sm:$0xff]
    %v118 = vld [vmem:[%s3 + $0x8] sm:$0xff]
    %v119 = vld [vmem:[%s3 + $0x10] sm:$0xff]
    %v120 = vld [vmem:[%s3 + $0x18] sm:$0xff]
    %v121 = vld [vmem:[%s3 + $0x20] sm:$0xff]
    %v122 = vld [vmem:[%s3 + $0x28] sm:$0xff]
    %v123 = vld [vmem:[%s3 + $0x30] sm:$0xff]
    %v124 = vld [vmem:[%s3 + $0x38] sm:$0xff]
    %v125 = vld [vmem:[%s3 + $0x40] sm:$0xff]
    %v126 = vld [vmem:[%s3 + $0x48] sm:$0xff]
    %v127 = vld [vmem:[%s3 + $0x50] sm:$0xff]
    %v128 = vld [vmem:[%s3 + $0x58] sm:$0xff]
    %v129 = vld [vmem:[%s3 + $0x60] sm:$0xff]
    %v130 = vld [vmem:[%s3 + $0x68] sm:$0xff]
    %v131 = vld [vmem:[%s3 + $0x70] sm:$0xff]
    %v132 = vld [vmem:[%s3 + $0x78] sm:$0xff]
    %v133 = vld [vmem:[%s3 + $0x80] sm:$0xff]
    %v134 = vld [vmem:[%s3 + $0x88] sm:$0xff]
    %v135 = vld [vmem:[%s3 + $0x90] sm:$0xff]
    %v136 = vld [vmem:[%s3 + $0x98] sm:$0xff]
    %v137 = vld [vmem:[%s4] sm:$0x1]
    %v139 = vperm.slane %v137, 0
    %vm141 = vcmask 261120
    %v143 = vsel %vm141, %v114, 0
    %v146 = vsel %vm141, %v116, 0
    %148 = vmatpush.msra.mxu0 %v132
    %149 = vmatpush.msra.mxu0 %v131
    %150 = vmatpush.msra.mxu0 %v130
    %151 = vmatpush.msra.mxu0 %v129
    %152 = vmatpush.msra.mxu0 %v128
    %153 = vmatpush.msra.mxu0 %v127
    %154 = vmatpush.msra.mxu0 %v126
    %155 = vmatpush.msra.mxu0 %v125
    %156 = vmatpush.msra.mxu0 %v124
    %157 = vmatpush.msra.mxu0 %v123
    %158 = vmatpush.msra.mxu0 %v122
    %159 = vmatpush.msra.mxu0 %v121
    %160 = vmatpush.msra.mxu0 %v120
    %161 = vmatpush.msra.mxu0 %v119
    %162 = vmatpush.msra.mxu0 %v118
    %163 = vmatpush.msra.mxu0 %v117
    %164 = vmatmul.f32.gmra.mxu0 %v113
    %v165 = vpop.f32.mrf.mxu0
    %v166 = vadd.f32 %v139, %v165
    %167 = vmatmul.f32.gmra.mxu0 %v115
    %v168 = vpop.f32.mrf.mxu0
    %v169 = vadd.f32 %v139, %v168
    %170 = vdwg.mxu0
    %171 = vmatpush.msra.mxu0 0.0
    %172 = vmatpush.msra.mxu0 0.0
    %173 = vmatpush.msra.mxu0 0.0
    %174 = vmatpush.msra.mxu0 0.0
    %175 = vmatpush.msra.mxu0 0.0
    %176 = vmatpush.msra.mxu0 0.0
    %177 = vmatpush.msra.mxu0 0.0
    %178 = vmatpush.msra.mxu0 0.0
    %179 = vmatpush.msra.mxu0 0.0
    %180 = vmatpush.msra.mxu0 0.0
    %181 = vmatpush.msra.mxu0 0.0
    %182 = vmatpush.msra.mxu0 0.0
    %183 = vmatpush.msra.mxu0 %v136
    %184 = vmatpush.msra.mxu0 %v135
    %185 = vmatpush.msra.mxu0 %v134
    %186 = vmatpush.msra.mxu0 %v133
    %187 = vmatmul.f32.gmra.mxu0 %v143
    %v188 = vpop.f32.mrf.mxu0
    %v189 = vadd.f32 %v166, %v188
    %190 = vmatmul.f32.gmra.mxu0 %v146
    %v191 = vpop.f32.mrf.mxu0
    %v192 = vadd.f32 %v169, %v191
    %193 = vdwg.mxu0
    %v194 = vmax.f32 %v189, 0.0
    %v195 = vmax.f32 %v192, 0.0
    %v196 = vld [vmem:[%s5] sm:$0xff]
    %v197 = vld [vmem:[%s5 + $0x8] sm:$0xff]
    %v198 = vld [vmem:[%s5 + $0x10] sm:$0xff]
    %v199 = vld [vmem:[%s5 + $0x18] sm:$0xff]
    %v200 = vld [vmem:[%s6] sm:$0x1]
    %v202 = vperm.slane %v200, 0
    %v205 = vsel %vm141, %v194, 0
    %v208 = vsel %vm141, %v195, 0
    %210 = vmatpush.msra.mxu0 0.0
    %211 = vmatpush.msra.mxu0 0.0
    %212 = vmatpush.msra.mxu0 0.0
    %213 = vmatpush.msra.mxu0 0.0
    %214 = vmatpush.msra.mxu0 0.0
    %215 = vmatpush.msra.mxu0 0.0
    %216 = vmatpush.msra.mxu0 0.0
    %217 = vmatpush.msra.mxu0 0.0
    %218 = vmatpush.msra.mxu0 0.0
    %219 = vmatpush.msra.mxu0 0.0
    %220 = vmatpush.msra.mxu0 0.0
    %221 = vmatpush.msra.mxu0 0.0
    %222 = vmatpush.msra.mxu0 %v199
    %223 = vmatpush.msra.mxu0 %v198
    %224 = vmatpush.msra.mxu0 %v197
    %225 = vmatpush.msra.mxu0 %v196
    %226 = vmatmul.f32.gmra.mxu0 %v205
    %v227 = vpop.f32.mrf.mxu0
    %v228 = vadd.f32 %v202, %v227
    %229 = vmatmul.f32.gmra.mxu0 %v208
    %v230 = vpop.f32.mrf.mxu0
    %v231 = vadd.f32 %v202, %v230
    %232 = vdwg.mxu0
    %233 = vst [vmem:[#allocation2] sm:$0xff] %v228
    %234 = vst [vmem:[#allocation2 + $0x8] sm:$0xff] %v231
    // Predicated region
    $region30: #{tpu_custom_call.1} parent=1 // pred_check
      _
    $region31: #{tpu_custom_call.1} parent=1 // pred_check_branch
      %236 = sbr.rel (0) target = $region33
    $region32: #{tpu_custom_call.1} parent=1 // pred_region
      %238 = vsyncadd [#allocation3], 0
      %s239 = sshll.u32 [#allocation2], 4
      %s240 = int_to_ptr.vmem [resolvable:$true] %s239
      %s241 = sshll.u32 %s7, 4
      %s242 = int_to_ptr.hbm [resolvable:$true] %s241
      %247 = dma.vmem_to_hbm [thread:$0]  %s240, 256, %s242, [#allocation3], 128, 128, 8
    $region33: #{tpu_custom_call.1} parent=1 // pred_fallthru
      _
    // Predicated region
    $region34: #{tpu_custom_call.1} parent=1 // pred_check
      _
    $region35: #{tpu_custom_call.1} parent=1 // pred_check_branch
      %249 = sbr.rel (0) target = $region37
    $region36: #{tpu_custom_call.1} parent=1 // pred_region
      %251 = dma.done [#allocation3], 256
    $region37: #{tpu_custom_call.1} parent=1 // pred_fallthru
      _
    %252 = vsyncpa [#allocation3], 1

</llo_original>
